<compile_context>
chip_gen: v7x
topology: tpu7x:2x2x1
jax: 0.10.0
libtpu: 0.0.40
codegen_flags: <defaults>
</compile_context>

<pallas_src>
import functools

import numpy as np
import jax
import jax.numpy as jnp
from jax.experimental import pallas as pl
from jax.experimental.pallas import tpu as pltpu


def _round_up(n: int, m: int) -> int:
    return ((n + m - 1) // m) * m


def _cdiv(a: int, b: int) -> int:
    return (a + b - 1) // b


def fcnet_kernel(*refs):
    """Fused MLP forward for one batch tile, entirely in VMEM.

    refs = (x_ref, W0_ref, b0_ref, ..., W{L-1}_ref, b{L-1}_ref, o_ref)

      h   = relu(x @ W0 + b0)
      h   = relu(h @ Wl + bl)   for l = 1 .. L-2   (Dropout is identity in eval)
      out = h @ W{L-1} + b{L-1}
    """
    x_ref, *wb_refs, o_ref = refs
    n_layers = len(wb_refs) // 2

    h = x_ref[...]
    for l in range(n_layers):
        w_ref = wb_refs[2 * l]
        b_ref = wb_refs[2 * l + 1]
        # Hidden layers: bf16 matmul inputs, f32 MXU accumulation; last layer f32.
        h = jnp.dot(h.astype(w_ref.dtype), w_ref[...],
                    preferred_element_type=jnp.float32) + b_ref[...]
        if l < n_layers - 1:
            # TODO(synk): training-mode Dropout (p=0.5) omitted — forward is
            # eval-mode (nn.Dropout is identity under model.eval()).
            h = jnp.maximum(h, 0.0)
    o_ref[...] = h.astype(o_ref.dtype)


def prepare_fcnet_params(params, compute_dtype=jnp.bfloat16):
    """One-time parameter prep (do NOT call per forward).

    Hidden-layer weights -> bf16 (native MXU input dtype); last-layer weights stay
    f32 (tiny matmul, tighter parity with PyTorch); biases -> f32.
    """
    n = len(params)
    prepped = []
    for l, (w, b) in enumerate(params):
        w_dtype = jnp.float32 if l == n - 1 else compute_dtype
        prepped.append((jnp.asarray(w, dtype=w_dtype),
                        jnp.asarray(b, dtype=jnp.float32)))
    return tuple(prepped)


def _resident_spec(shape, single_buffer):
    """Whole-array block with constant index_map (stays VMEM-resident across steps)."""
    if single_buffer:
        try:
            return pl.BlockSpec(shape, lambda i: (0, 0), pipeline_mode=pl.Buffered(1))
        except TypeError:  # older BlockSpec without pipeline_mode
            pass
    return pl.BlockSpec(shape, lambda i: (0, 0))


def _vmem_cap_bytes():
    """Per-generation VMEM cap with headroom (never the full physical VMEM)."""
    try:
        cap = int(getattr(pltpu.get_tpu_info(), "vmem_capacity_bytes"))
        return max(cap - (16 << 20), 32 << 20)      # ~48 MiB on v7x, ~112 MiB v5e/v6e
    except Exception:
        return 48 << 20                             # safe on every generation


@functools.partial(jax.jit, static_argnames=("batch_tile", "min_grid_steps"))
def fcnet_forward(x, prepped_params, *, batch_tile=512, min_grid_steps=2):
    """x: (B, D_in) f32.  prepped_params: output of prepare_fcnet_params()."""
    B, d_in = x.shape
    d_out = prepped_params[-1][0].shape[1]
    x_dtype = prepped_params[0][0].dtype            # bf16 (f32 if single-layer net)
    row_align = 8 * max(1, 4 // np.dtype(x_dtype).itemsize)

    # Batch-only grid.  n_steps amortizes the ~0.35us/step overhead, is >= 2 for
    # medium/large batches (megacore on v7x), and bt is fitted to B so the
    # zero-padding of the last tile stays small.
    n_steps = _cdiv(B, batch_tile)
    if B >= min_grid_steps * row_align:
        n_steps = max(n_steps, min_grid_steps)
    bt = _round_up(_cdiv(B, n_steps), row_align)
    b_pad = _round_up(B, bt)
    grid = (b_pad // bt,)

    # Single cast of x to the MXU input dtype; zero-pad only if needed.
    xp = x.astype(x_dtype)
    if b_pad != B:
        xp = jnp.zeros((b_pad, d_in), x_dtype).at[:B, :].set(xp)

    flops = 0
    weight_bytes = 0
    for w, b in prepped_params:
        flops += 2 * b_pad * int(w.shape[0]) * int(w.shape[1])
        weight_bytes += int(w.size) * w.dtype.itemsize + int(b.size) * b.dtype.itemsize
    single_buffer_weights = weight_bytes > (4 << 20)

    flat = [xp]
    in_specs = [pl.BlockSpec((bt, d_in), lambda i: (i, 0))]
    for w, b in prepped_params:
        flat.extend([w, b])
        in_specs.append(_resident_spec(w.shape, single_buffer_weights))
        in_specs.append(_resident_spec(b.shape, single_buffer_weights))

    # VMEM budget from the actual footprint (double-buffered x/out tiles plus the
    # resident weights) + headroom for compiler temporaries, capped per generation.
    tile_bytes = bt * d_in * np.dtype(x_dtype).itemsize + bt * d_out * 4
    wmult = 1 if single_buffer_weights else 2
    vmem_limit = int(min(max(2 * tile_bytes + wmult * weight_bytes + (16 << 20),
                             32 << 20),
                         _vmem_cap_bytes()))

    bytes_accessed = (int(xp.size) * xp.dtype.itemsize + weight_bytes
                      + b_pad * d_out * 4)

    out = pl.pallas_call(
        fcnet_kernel,
        out_shape=jax.ShapeDtypeStruct((b_pad, d_out), jnp.float32),
        grid=grid,
        in_specs=in_specs,
        # Unpadded output block: last dim equals the full array dim, so the masked
        # store is legal and writeback traffic is 16x smaller than a 128-lane pad.
        out_specs=pl.BlockSpec((bt, d_out), lambda i: (i, 0)),
        compiler_params=pltpu.CompilerParams(
            dimension_semantics=("parallel",),      # megacore / 2 TCs on v7x
            vmem_limit_bytes=vmem_limit),
        cost_estimate=pl.CostEstimate(flops=int(flops), transcendentals=0,
                                      bytes_accessed=int(bytes_accessed)),
    )(*flat)

    return out if b_pad == B else out[:B]


def init_fcnet_params(key, input_dim, output_dim, n_layers=4, hidden_dim=128):
    """Deterministic PyTorch-style init: U(-1/sqrt(fan_in), 1/sqrt(fan_in))."""
    dims = [input_dim] + [hidden_dim] * (n_layers - 1) + [output_dim]
    params = []
    for l in range(n_layers):
        fan_in, fan_out = dims[l], dims[l + 1]
        key, kw, kb = jax.random.split(key, 3)
        bound = 1.0 / jnp.sqrt(fan_in)
        w = jax.random.uniform(kw, (fan_in, fan_out), jnp.float32, -bound, bound)
        b = jax.random.uniform(kb, (1, fan_out), jnp.float32, -bound, bound)
        params.append((w, b))
    return params


def fcnet_reference_f32(x, params):
    """Plain-JAX f32 reference of the eval-mode forward (PyTorch semantics)."""
    h = x
    n = len(params)
    for l, (w, b) in enumerate(params):
        h = h @ w + b
        if l < n - 1:
            h = jnp.maximum(h, 0.0)
    return h


def fcnet_reference_prepped(x, prepped_params):
    """Reference mirroring the kernel numerics (bf16 hidden matmuls, f32 last layer)."""
    h = x
    n = len(prepped_params)
    for l, (w, b) in enumerate(prepped_params):
        h = jnp.dot(h.astype(w.dtype), w, preferred_element_type=jnp.float32) + b
        if l < n - 1:
            h = jnp.maximum(h, 0.0)
    return h


if __name__ == "__main__":
    key = jax.random.PRNGKey(0)

    B, INPUT_DIM, OUTPUT_DIM, HIDDEN_DIM, N_LAYERS = 16, 32, 8, 128, 4

    key, kx = jax.random.split(key)
    x = jax.random.normal(kx, (B, INPUT_DIM), jnp.float32)
    params = init_fcnet_params(key, INPUT_DIM, OUTPUT_DIM,
                               n_layers=N_LAYERS, hidden_dim=HIDDEN_DIM)
    prepped = prepare_fcnet_params(params)        # one-time param prep (bf16 cast)

    # B=16 runs as a single grid step; no batch padding, x only gets an astype.
    out = fcnet_forward(x, prepped)
    out = jax.block_until_ready(out)
    assert out.shape == (B, OUTPUT_DIM)

    ref_same = fcnet_reference_prepped(x, prepped)
    assert jnp.allclose(out, ref_same, atol=3e-2, rtol=3e-2), "mismatch vs matched-numerics reference"

    ref_f32 = fcnet_reference_f32(x, params)
    assert float(jnp.max(jnp.abs(out - ref_f32))) < 1.5e-1, "mismatch vs f32 reference"

    # Also exercise the multi-step / padded-batch path (B=300 -> 2 tiles of 160 rows).
    key, kx2 = jax.random.split(key)
    x2 = jax.random.normal(kx2, (300, INPUT_DIM), jnp.float32)
    out2 = jax.block_until_ready(fcnet_forward(x2, prepped))
    assert out2.shape == (300, OUTPUT_DIM)
    ref2 = fcnet_reference_prepped(x2, prepped)
    assert jnp.allclose(out2, ref2, atol=3e-2, rtol=3e-2), "mismatch on padded-batch path"

    print("KERNEL_OK")
</pallas_src>

<mosaic_0001>
module attributes {stable_mosaic.version = 11 : i64} {
  func.func @fcnet_kernel(%arg0: i32, %arg1: memref<16x32xbf16, #tpu.memory_space<vmem>>, %arg2: memref<32x128xbf16, #tpu.memory_space<vmem>>, %arg3: memref<1x128xf32, #tpu.memory_space<vmem>>, %arg4: memref<128x128xbf16, #tpu.memory_space<vmem>>, %arg5: memref<1x128xf32, #tpu.memory_space<vmem>>, %arg6: memref<128x128xbf16, #tpu.memory_space<vmem>>, %arg7: memref<1x128xf32, #tpu.memory_space<vmem>>, %arg8: memref<128x8xf32, #tpu.memory_space<vmem>>, %arg9: memref<1x8xf32, #tpu.memory_space<vmem>>, %arg10: memref<16x8xf32, #tpu.memory_space<vmem>>) attributes {dimension_semantics = [#tpu.dimension_semantics<parallel>], iteration_bounds = array<i64: 1>, scalar_prefetch = 0 : i64, scratch_operands = 0 : i64, tpu.core_type = #tpu.core_type<tc>, window_params = [{transform_indices = @transform_0, window_bounds = array<i64: 16, 32>}, {pipeline_mode = #tpu.pipeline_mode<synchronous>, transform_indices = @transform_1, window_bounds = array<i64: 32, 128>}, {pipeline_mode = #tpu.pipeline_mode<synchronous>, transform_indices = @transform_2, window_bounds = array<i64: 1, 128>}, {pipeline_mode = #tpu.pipeline_mode<synchronous>, transform_indices = @transform_3, window_bounds = array<i64: 128, 128>}, {pipeline_mode = #tpu.pipeline_mode<synchronous>, transform_indices = @transform_4, window_bounds = array<i64: 1, 128>}, {pipeline_mode = #tpu.pipeline_mode<synchronous>, transform_indices = @transform_5, window_bounds = array<i64: 128, 128>}, {pipeline_mode = #tpu.pipeline_mode<synchronous>, transform_indices = @transform_6, window_bounds = array<i64: 1, 128>}, {pipeline_mode = #tpu.pipeline_mode<synchronous>, transform_indices = @transform_7, window_bounds = array<i64: 128, 8>}, {pipeline_mode = #tpu.pipeline_mode<synchronous>, transform_indices = @transform_8, window_bounds = array<i64: 1, 8>}, {transform_indices = @transform_9, window_bounds = array<i64: 16, 8>}]} {
    %c0 = arith.constant 0 : index
    %c0_0 = arith.constant 0 : index
    %0 = vector.load %arg1[%c0, %c0_0] : memref<16x32xbf16, #tpu.memory_space<vmem>>, vector<16x32xbf16>
    %c0_1 = arith.constant 0 : index
    %c0_2 = arith.constant 0 : index
    %1 = vector.load %arg2[%c0_1, %c0_2] : memref<32x128xbf16, #tpu.memory_space<vmem>>, vector<32x128xbf16>
    %cst = arith.constant dense<0.000000e+00> : vector<16x128xf32>
    %2 = tpu.matmul %0, %1, %cst {dimension_numbers = #tpu.dot_dimension_numbers<[1], [0], [0], [1], [0, 0, 1, 1], [], []>} : vector<16x32xbf16>, vector<32x128xbf16>, vector<16x128xf32> -> vector<16x128xf32>
    %c0_3 = arith.constant 0 : index
    %c0_4 = arith.constant 0 : index
    %3 = vector.load %arg3[%c0_3, %c0_4] : memref<1x128xf32, #tpu.memory_space<vmem>>, vector<1x128xf32>
    %4 = vector.broadcast %3 : vector<1x128xf32> to vector<16x128xf32>
    %5 = arith.addf %2, %4 : vector<16x128xf32>
    %cst_5 = arith.constant 0.000000e+00 : f32
    %6 = vector.broadcast %cst_5 : f32 to vector<16x128xf32>
    %7 = arith.maximumf %5, %6 : vector<16x128xf32>
    %8 = arith.truncf %7 : vector<16x128xf32> to vector<16x128xbf16>
    %c0_6 = arith.constant 0 : index
    %c0_7 = arith.constant 0 : index
    %9 = vector.load %arg4[%c0_6, %c0_7] : memref<128x128xbf16, #tpu.memory_space<vmem>>, vector<128x128xbf16>
    %cst_8 = arith.constant dense<0.000000e+00> : vector<16x128xf32>
    %10 = tpu.matmul %8, %9, %cst_8 {dimension_numbers = #tpu.dot_dimension_numbers<[1], [0], [0], [1], [0, 0, 1, 1], [], []>} : vector<16x128xbf16>, vector<128x128xbf16>, vector<16x128xf32> -> vector<16x128xf32>
    %c0_9 = arith.constant 0 : index
    %c0_10 = arith.constant 0 : index
    %11 = vector.load %arg5[%c0_9, %c0_10] : memref<1x128xf32, #tpu.memory_space<vmem>>, vector<1x128xf32>
    %12 = vector.broadcast %11 : vector<1x128xf32> to vector<16x128xf32>
    %13 = arith.addf %10, %12 : vector<16x128xf32>
    %cst_11 = arith.constant 0.000000e+00 : f32
    %14 = vector.broadcast %cst_11 : f32 to vector<16x128xf32>
    %15 = arith.maximumf %13, %14 : vector<16x128xf32>
    %16 = arith.truncf %15 : vector<16x128xf32> to vector<16x128xbf16>
    %c0_12 = arith.constant 0 : index
    %c0_13 = arith.constant 0 : index
    %17 = vector.load %arg6[%c0_12, %c0_13] : memref<128x128xbf16, #tpu.memory_space<vmem>>, vector<128x128xbf16>
    %cst_14 = arith.constant dense<0.000000e+00> : vector<16x128xf32>
    %18 = tpu.matmul %16, %17, %cst_14 {dimension_numbers = #tpu.dot_dimension_numbers<[1], [0], [0], [1], [0, 0, 1, 1], [], []>} : vector<16x128xbf16>, vector<128x128xbf16>, vector<16x128xf32> -> vector<16x128xf32>
    %c0_15 = arith.constant 0 : index
    %c0_16 = arith.constant 0 : index
    %19 = vector.load %arg7[%c0_15, %c0_16] : memref<1x128xf32, #tpu.memory_space<vmem>>, vector<1x128xf32>
    %20 = vector.broadcast %19 : vector<1x128xf32> to vector<16x128xf32>
    %21 = arith.addf %18, %20 : vector<16x128xf32>
    %cst_17 = arith.constant 0.000000e+00 : f32
    %22 = vector.broadcast %cst_17 : f32 to vector<16x128xf32>
    %23 = arith.maximumf %21, %22 : vector<16x128xf32>
    %c0_18 = arith.constant 0 : index
    %c0_19 = arith.constant 0 : index
    %24 = vector.load %arg8[%c0_18, %c0_19] : memref<128x8xf32, #tpu.memory_space<vmem>>, vector<128x8xf32>
    %cst_20 = arith.constant dense<0.000000e+00> : vector<16x8xf32>
    %25 = tpu.matmul %23, %24, %cst_20 {dimension_numbers = #tpu.dot_dimension_numbers<[1], [0], [0], [1], [0, 0, 1, 1], [], []>} : vector<16x128xf32>, vector<128x8xf32>, vector<16x8xf32> -> vector<16x8xf32>
    %c0_21 = arith.constant 0 : index
    %c0_22 = arith.constant 0 : index
    %26 = vector.load %arg9[%c0_21, %c0_22] : memref<1x8xf32, #tpu.memory_space<vmem>>, vector<1x8xf32>
    %27 = vector.broadcast %26 : vector<1x8xf32> to vector<16x8xf32>
    %28 = arith.addf %25, %27 : vector<16x8xf32>
    %c0_23 = arith.constant 0 : index
    %c0_24 = arith.constant 0 : index
    %29 = vector.load %arg10[%c0_23, %c0_24] : memref<16x8xf32, #tpu.memory_space<vmem>>, vector<16x8xf32>
    tpu.vector_store %arg10[%c0_23, %c0_24], %28 {strides = array<i32>} : memref<16x8xf32, #tpu.memory_space<vmem>>, vector<16x8xf32>,
    return
  }
  func.func @transform_0(%arg0: i32) -> (i32, i32) {
    %c0_i32 = arith.constant 0 : i32
    %c0_i32_0 = arith.constant 0 : i32
    return %arg0, %c0_i32 : i32, i32
  }
  func.func @transform_1(%arg0: i32) -> (i32, i32) {
    %c0_i32 = arith.constant 0 : i32
    %c0_i32_0 = arith.constant 0 : i32
    %c0_i32_1 = arith.constant 0 : i32
    return %c0_i32, %c0_i32_0 : i32, i32
  }
  func.func @transform_2(%arg0: i32) -> (i32, i32) {
    %c0_i32 = arith.constant 0 : i32
    %c0_i32_0 = arith.constant 0 : i32
    %c0_i32_1 = arith.constant 0 : i32
    return %c0_i32, %c0_i32_0 : i32, i32
  }
  func.func @transform_3(%arg0: i32) -> (i32, i32) {
    %c0_i32 = arith.constant 0 : i32
    %c0_i32_0 = arith.constant 0 : i32
    %c0_i32_1 = arith.constant 0 : i32
    return %c0_i32, %c0_i32_0 : i32, i32
  }
  func.func @transform_4(%arg0: i32) -> (i32, i32) {
    %c0_i32 = arith.constant 0 : i32
    %c0_i32_0 = arith.constant 0 : i32
    %c0_i32_1 = arith.constant 0 : i32
    return %c0_i32, %c0_i32_0 : i32, i32
  }
  func.func @transform_5(%arg0: i32) -> (i32, i32) {
    %c0_i32 = arith.constant 0 : i32
    %c0_i32_0 = arith.constant 0 : i32
    %c0_i32_1 = arith.constant 0 : i32
    return %c0_i32, %c0_i32_0 : i32, i32
  }
  func.func @transform_6(%arg0: i32) -> (i32, i32) {
    %c0_i32 = arith.constant 0 : i32
    %c0_i32_0 = arith.constant 0 : i32
    %c0_i32_1 = arith.constant 0 : i32
    return %c0_i32, %c0_i32_0 : i32, i32
  }
  func.func @transform_7(%arg0: i32) -> (i32, i32) {
    %c0_i32 = arith.constant 0 : i32
    %c0_i32_0 = arith.constant 0 : i32
    %c0_i32_1 = arith.constant 0 : i32
    return %c0_i32, %c0_i32_0 : i32, i32
  }
  func.func @transform_8(%arg0: i32) -> (i32, i32) {
    %c0_i32 = arith.constant 0 : i32
    %c0_i32_0 = arith.constant 0 : i32
    %c0_i32_1 = arith.constant 0 : i32
    return %c0_i32, %c0_i32_0 : i32, i32
  }
  func.func @transform_9(%arg0: i32) -> (i32, i32) {
    %c0_i32 = arith.constant 0 : i32
    %c0_i32_0 = arith.constant 0 : i32
    return %arg0, %c0_i32 : i32, i32
  }
}

</mosaic_0001>

<llo_original>
// kernel: fcnet_forward.1
$region0: #{fcnet_forward.1}
  #allocation0 [shape = 'u32[]', space=smem, size = 0x4, offset = 0x4, fixed_abs, tag = 'smem constant byte address 0x4 - core index']
  #allocation1 [shape = 'u32[144,128]{1,0:T(1,128)}', space=vmem, size = 0x12000, scoped, tag = 'internal scratch']
  %s0 = inlined_call_operand.vmem [shape: bf16[16,32], index: 0, kind: input, shape index: {}]
  %s1 = inlined_call_operand.vmem [shape: bf16[32,128], index: 1, kind: input, shape index: {}]
  %s2 = inlined_call_operand.vmem [shape: f32[1,128], index: 2, kind: input, shape index: {}]
  %s3 = inlined_call_operand.vmem [shape: bf16[128,128], index: 3, kind: input, shape index: {}]
  %s4 = inlined_call_operand.vmem [shape: f32[1,128], index: 4, kind: input, shape index: {}]
  %s5 = inlined_call_operand.vmem [shape: bf16[128,128], index: 5, kind: input, shape index: {}]
  %s6 = inlined_call_operand.vmem [shape: f32[1,128], index: 6, kind: input, shape index: {}]
  %s7 = inlined_call_operand.vmem [shape: f32[128,8], index: 7, kind: input, shape index: {}]
  %s8 = inlined_call_operand.vmem [shape: f32[1,8], index: 8, kind: input, shape index: {}]
  %s9 = inlined_call_operand.vmem [shape: f32[16,8], index: 9, kind: output, shape index: {}]
  %s10 = sld [smem:[#allocation0]]
  $region46: #{fcnet_forward.1} parent=0
    _
  %s12 = ssub.s32 1, %s10
  %s13 = scalar_select 0, %s12, %s10
  // Predicated region
  $region2: #{fcnet_forward.1} parent=0 // pred_check
    _
  $region3: #{fcnet_forward.1} parent=0 // pred_check_branch
    %15 = sbr.rel (0) target = $region5
  $region4: #{fcnet_forward.1} parent=0 // pred_region
    _
  $region5: #{fcnet_forward.1} parent=0 // pred_fallthru
    _
  // Predicated region
  $region6: #{fcnet_forward.1} parent=0 // pred_check
    _
  $region7: #{fcnet_forward.1} parent=0 // pred_check_branch
    %17 = sbr.rel (0) target = $region9
  $region8: #{fcnet_forward.1} parent=0 // pred_region
    _
  $region9: #{fcnet_forward.1} parent=0 // pred_fallthru
    _
  // Predicated region
  $region10: #{fcnet_forward.1} parent=0 // pred_check
    _
  $region11: #{fcnet_forward.1} parent=0 // pred_check_branch
    %19 = sbr.rel (0) target = $region13
  $region12: #{fcnet_forward.1} parent=0 // pred_region
    _
  $region13: #{fcnet_forward.1} parent=0 // pred_fallthru
    _
  // Predicated region
  $region14: #{fcnet_forward.1} parent=0 // pred_check
    _
  $region15: #{fcnet_forward.1} parent=0 // pred_check_branch
    %21 = sbr.rel (0) target = $region17
  $region16: #{fcnet_forward.1} parent=0 // pred_region
    _
  $region17: #{fcnet_forward.1} parent=0 // pred_fallthru
    _
  // Predicated region
  $region18: #{fcnet_forward.1} parent=0 // pred_check
    _
  $region19: #{fcnet_forward.1} parent=0 // pred_check_branch
    %23 = sbr.rel (0) target = $region21
  $region20: #{fcnet_forward.1} parent=0 // pred_region
    _
  $region21: #{fcnet_forward.1} parent=0 // pred_fallthru
    _
  // Predicated region
  $region22: #{fcnet_forward.1} parent=0 // pred_check
    _
  $region23: #{fcnet_forward.1} parent=0 // pred_check_branch
    %25 = sbr.rel (0) target = $region25
  $region24: #{fcnet_forward.1} parent=0 // pred_region
    _
  $region25: #{fcnet_forward.1} parent=0 // pred_fallthru
    _
  // Predicated region
  $region26: #{fcnet_forward.1} parent=0 // pred_check
    _
  $region27: #{fcnet_forward.1} parent=0 // pred_check_branch
    %27 = sbr.rel (0) target = $region29
  $region28: #{fcnet_forward.1} parent=0 // pred_region
    _
  $region29: #{fcnet_forward.1} parent=0 // pred_fallthru
    _
  // Predicated region
  $region30: #{fcnet_forward.1} parent=0 // pred_check
    _
  $region31: #{fcnet_forward.1} parent=0 // pred_check_branch
    %29 = sbr.rel (0) target = $region33
  $region32: #{fcnet_forward.1} parent=0 // pred_region
    _
  $region33: #{fcnet_forward.1} parent=0 // pred_fallthru
    _
  // Predicated region
  $region34: #{fcnet_forward.1} parent=0 // pred_check
    _
  $region35: #{fcnet_forward.1} parent=0 // pred_check_branch
    %31 = sbr.rel (0) target = $region37
  $region36: #{fcnet_forward.1} parent=0 // pred_region
    _
  $region37: #{fcnet_forward.1} parent=0 // pred_fallthru
    _
  %v33 = vld [vmem:[%s0] sm:$0xf]
  %v34 = vld [vmem:[%s0 + $0x4] sm:$0xf]
  %v35 = vld [vmem:[%s1] sm:$0xf]
  %v36 = vld [vmem:[%s1 + $0x4] sm:$0xf]
  %v37 = vld [vmem:[%s1 + $0x8] sm:$0xf]
  %v38 = vld [vmem:[%s1 + $0xc] sm:$0xf]
  %v39 = vld [vmem:[%s2] sm:$0x1]
  %v41 = vlaneseq
  %v42 = vshrl.u32 %v41, 7
  %v43 = vsub.s32 0, %v42
  %v44 = vrot.slane %v39, %v43
  %v48 = vunpack.c.l.b16 %v33
  %v49 = vunpack.c.l.b16 %v34
  %v50 = vpack.c.b16 %v49, %v48
  %v55 = vunpack.c.l.b16 %v35
  %v56 = vunpack.c.l.b16 %v36
  %v57 = vunpack.c.l.b16 %v37
  %v58 = vunpack.c.l.b16 %v38
  %v59 = vpack.c.b16 %v56, %v55
  %v60 = vpack.c.b16 %v58, %v57
  %vm63 = vcmask 261120
  %v65 = vsel %vm63, %v50, 0
  %67 = vmatprep.subr.bf16.mxu0 0
  %68 = vmatpush1.bf16.msra.mxu0 %v59
  %69 = vmatprep.subr.bf16.mxu0 0
  %70 = vmatpush1.bf16.msra.mxu0 %v60
  %71 = vmatprep.subr.bf16.mxu0 0
  %72 = vmatpush1.bf16.msra.mxu0 0
  %73 = vmatprep.subr.bf16.mxu0 0
  %74 = vmatpush1.bf16.msra.mxu0 0
  %75 = vmatprep.subr.bf16.mxu0 0
  %76 = vmatpush1.bf16.msra.mxu0 0
  %77 = vmatprep.subr.bf16.mxu0 0
  %78 = vmatpush1.bf16.msra.mxu0 0
  %79 = vmatprep.subr.bf16.mxu0 0
  %80 = vmatpush1.bf16.msra.mxu0 0
  %81 = vmatprep.subr.bf16.mxu0 0
  %82 = vmatpush1.bf16.msra.mxu0 0
  %83 = vmatprep.subr.bf16.mxu0 0
  %84 = vmatpush1.bf16.msra.mxu0 0
  %85 = vmatprep.subr.bf16.mxu0 0
  %86 = vmatpush1.bf16.msra.mxu0 0
  %87 = vmatprep.subr.bf16.mxu0 0
  %88 = vmatpush1.bf16.msra.mxu0 0
  %89 = vmatprep.subr.bf16.mxu0 0
  %90 = vmatpush1.bf16.msra.mxu0 0
  %91 = vmatprep.subr.bf16.mxu0 0
  %92 = vmatpush1.bf16.msra.mxu0 0
  %93 = vmatprep.subr.bf16.mxu0 0
  %94 = vmatpush1.bf16.msra.mxu0 0
  %95 = vmatprep.subr.bf16.mxu0 0
  %96 = vmatpush1.bf16.msra.mxu0 0
  %97 = vmatprep.subr.bf16.mxu0 0
  %98 = vmatpush1.bf16.msra.mxu0 0
  %99 = vmatprep.mubr.bf16.mxu0 0
  %100 = vmatmul.mubr.bf16.gmra.mrb[0].mxu0 %v65
  %v101 = vpop.f32.mrb[0].mxu0
  %v102 = vadd.f32 %v44, %v101
  %v103 = vpop.f32.mrb[0].mxu0
  %v104 = vpop.f32.mrb[0].mxu0
  %v105 = vadd.f32 %v44, %v104
  %v106 = vpop.f32.mrb[0].mxu0
  %107 = vdwg.mxu0
  %v108 = vmax.f32 %v102, 0.0
  %v109 = vmax.f32 %v105, 0.0
  %v110 = vpack.c.bf16 %v109, %v108
  %v111 = vld [vmem:[%s3] sm:$0xf]
  %v112 = vld [vmem:[%s3 + $0x4] sm:$0xf]
  %v113 = vld [vmem:[%s3 + $0x8] sm:$0xf]
  %v114 = vld [vmem:[%s3 + $0xc] sm:$0xf]
  %v115 = vld [vmem:[%s3 + $0x10] sm:$0xf]
  %v116 = vld [vmem:[%s3 + $0x14] sm:$0xf]
  %v117 = vld [vmem:[%s3 + $0x18] sm:$0xf]
  %v118 = vld [vmem:[%s3 + $0x1c] sm:$0xf]
  %v119 = vld [vmem:[%s3 + $0x20] sm:$0xf]
  %v120 = vld [vmem:[%s3 + $0x24] sm:$0xf]
  %v121 = vld [vmem:[%s3 + $0x28] sm:$0xf]
  %v122 = vld [vmem:[%s3 + $0x2c] sm:$0xf]
  %v123 = vld [vmem:[%s3 + $0x30] sm:$0xf]
  %v124 = vld [vmem:[%s3 + $0x34] sm:$0xf]
  %v125 = vld [vmem:[%s3 + $0x38] sm:$0xf]
  %v126 = vld [vmem:[%s3 + $0x3c] sm:$0xf]
  %v127 = vld [vmem:[%s4] sm:$0x1]
  %v129 = vlaneseq
  %v130 = vshrl.u32 %v129, 7
  %v131 = vsub.s32 0, %v130
  %v132 = vrot.slane %v127, %v131
  %v150 = vunpack.c.l.b16 %v111
  %v151 = vunpack.c.l.b16 %v112
  %v152 = vunpack.c.l.b16 %v113
  %v153 = vunpack.c.l.b16 %v114
  %v154 = vunpack.c.l.b16 %v115
  %v155 = vunpack.c.l.b16 %v116
  %v156 = vunpack.c.l.b16 %v117
  %v157 = vunpack.c.l.b16 %v118
  %v158 = vunpack.c.l.b16 %v119
  %v159 = vunpack.c.l.b16 %v120
  %v160 = vunpack.c.l.b16 %v121
  %v161 = vunpack.c.l.b16 %v122
  %v162 = vunpack.c.l.b16 %v123
  %v163 = vunpack.c.l.b16 %v124
  %v164 = vunpack.c.l.b16 %v125
  %v165 = vunpack.c.l.b16 %v126
  %v166 = vpack.c.b16 %v151, %v150
  %v167 = vpack.c.b16 %v153, %v152
  %v168 = vpack.c.b16 %v155, %v154
  %v169 = vpack.c.b16 %v157, %v156
  %v170 = vpack.c.b16 %v159, %v158
  %v171 = vpack.c.b16 %v161, %v160
  %v172 = vpack.c.b16 %v163, %v162
  %v173 = vpack.c.b16 %v165, %v164
  %182 = vmatprep.subr.bf16.mxu0 0
  %183 = vmatpush1.bf16.msra.mxu0 %v166
  %184 = vmatprep.subr.bf16.mxu0 0
  %185 = vmatpush1.bf16.msra.mxu0 %v167
  %186 = vmatprep.subr.bf16.mxu0 0
  %187 = vmatpush1.bf16.msra.mxu0 %v168
  %188 = vmatprep.subr.bf16.mxu0 0
  %189 = vmatpush1.bf16.msra.mxu0 %v169
  %190 = vmatprep.subr.bf16.mxu0 0
  %191 = vmatpush1.bf16.msra.mxu0 %v170
  %192 = vmatprep.subr.bf16.mxu0 0
  %193 = vmatpush1.bf16.msra.mxu0 %v171
  %194 = vmatprep.subr.bf16.mxu0 0
  %195 = vmatpush1.bf16.msra.mxu0 %v172
  %196 = vmatprep.subr.bf16.mxu0 0
  %197 = vmatpush1.bf16.msra.mxu0 %v173
  %198 = vmatprep.subr.bf16.mxu0 0
  %199 = vmatpush1.bf16.msra.mxu0 0
  %200 = vmatprep.subr.bf16.mxu0 0
  %201 = vmatpush1.bf16.msra.mxu0 0
  %202 = vmatprep.subr.bf16.mxu0 0
  %203 = vmatpush1.bf16.msra.mxu0 0
  %204 = vmatprep.subr.bf16.mxu0 0
  %205 = vmatpush1.bf16.msra.mxu0 0
  %206 = vmatprep.subr.bf16.mxu0 0
  %207 = vmatpush1.bf16.msra.mxu0 0
  %208 = vmatprep.subr.bf16.mxu0 0
  %209 = vmatpush1.bf16.msra.mxu0 0
  %210 = vmatprep.subr.bf16.mxu0 0
  %211 = vmatpush1.bf16.msra.mxu0 0
  %212 = vmatprep.subr.bf16.mxu0 0
  %213 = vmatpush1.bf16.msra.mxu0 0
  %214 = vmatprep.mubr.bf16.mxu0 0
  %215 = vmatmul.mubr.bf16.gmra.mrb[0].mxu0 %v110
  %v216 = vpop.f32.mrb[0].mxu0
  %v217 = vadd.f32 %v132, %v216
  %v218 = vpop.f32.mrb[0].mxu0
  %v219 = vpop.f32.mrb[0].mxu0
  %v220 = vadd.f32 %v132, %v219
  %v221 = vpop.f32.mrb[0].mxu0
  %222 = vdwg.mxu0
  %v223 = vmax.f32 %v217, 0.0
  %v224 = vmax.f32 %v220, 0.0
  %v225 = vpack.c.bf16 %v224, %v223
  %v226 = vld [vmem:[%s5] sm:$0xf]
  %v227 = vld [vmem:[%s5 + $0x4] sm:$0xf]
  %v228 = vld [vmem:[%s5 + $0x8] sm:$0xf]
  %v229 = vld [vmem:[%s5 + $0xc] sm:$0xf]
  %v230 = vld [vmem:[%s5 + $0x10] sm:$0xf]
  %v231 = vld [vmem:[%s5 + $0x14] sm:$0xf]
  %v232 = vld [vmem:[%s5 + $0x18] sm:$0xf]
  %v233 = vld [vmem:[%s5 + $0x1c] sm:$0xf]
  %v234 = vld [vmem:[%s5 + $0x20] sm:$0xf]
  %v235 = vld [vmem:[%s5 + $0x24] sm:$0xf]
  %v236 = vld [vmem:[%s5 + $0x28] sm:$0xf]
  %v237 = vld [vmem:[%s5 + $0x2c] sm:$0xf]
  %v238 = vld [vmem:[%s5 + $0x30] sm:$0xf]
  %v239 = vld [vmem:[%s5 + $0x34] sm:$0xf]
  %v240 = vld [vmem:[%s5 + $0x38] sm:$0xf]
  %v241 = vld [vmem:[%s5 + $0x3c] sm:$0xf]
  %v242 = vld [vmem:[%s6] sm:$0x1]
  %v244 = vlaneseq
  %v245 = vshrl.u32 %v244, 7
  %v246 = vsub.s32 0, %v245
  %v247 = vrot.slane %v242, %v246
  %v265 = vunpack.c.l.b16 %v226
  %v266 = vunpack.c.l.b16 %v227
  %v267 = vunpack.c.l.b16 %v228
  %v268 = vunpack.c.l.b16 %v229
  %v269 = vunpack.c.l.b16 %v230
  %v270 = vunpack.c.l.b16 %v231
  %v271 = vunpack.c.l.b16 %v232
  %v272 = vunpack.c.l.b16 %v233
  %v273 = vunpack.c.l.b16 %v234
  %v274 = vunpack.c.l.b16 %v235
  %v275 = vunpack.c.l.b16 %v236
  %v276 = vunpack.c.l.b16 %v237
  %v277 = vunpack.c.l.b16 %v238
  %v278 = vunpack.c.l.b16 %v239
  %v279 = vunpack.c.l.b16 %v240
  %v280 = vunpack.c.l.b16 %v241
  %v281 = vpack.c.b16 %v266, %v265
  %v282 = vpack.c.b16 %v268, %v267
  %v283 = vpack.c.b16 %v270, %v269
  %v284 = vpack.c.b16 %v272, %v271
  %v285 = vpack.c.b16 %v274, %v273
  %v286 = vpack.c.b16 %v276, %v275
  %v287 = vpack.c.b16 %v278, %v277
  %v288 = vpack.c.b16 %v280, %v279
  %297 = vmatprep.subr.bf16.mxu0 0
  %298 = vmatpush1.bf16.msra.mxu0 %v281
  %299 = vmatprep.subr.bf16.mxu0 0
  %300 = vmatpush1.bf16.msra.mxu0 %v282
  %301 = vmatprep.subr.bf16.mxu0 0
  %302 = vmatpush1.bf16.msra.mxu0 %v283
  %303 = vmatprep.subr.bf16.mxu0 0
  %304 = vmatpush1.bf16.msra.mxu0 %v284
  %305 = vmatprep.subr.bf16.mxu0 0
  %306 = vmatpush1.bf16.msra.mxu0 %v285
  %307 = vmatprep.subr.bf16.mxu0 0
  %308 = vmatpush1.bf16.msra.mxu0 %v286
  %309 = vmatprep.subr.bf16.mxu0 0
  %310 = vmatpush1.bf16.msra.mxu0 %v287
  %311 = vmatprep.subr.bf16.mxu0 0
  %312 = vmatpush1.bf16.msra.mxu0 %v288
  %313 = vmatprep.subr.bf16.mxu0 0
  %314 = vmatpush1.bf16.msra.mxu0 0
  %315 = vmatprep.subr.bf16.mxu0 0
  %316 = vmatpush1.bf16.msra.mxu0 0
  %317 = vmatprep.subr.bf16.mxu0 0
  %318 = vmatpush1.bf16.msra.mxu0 0
  %319 = vmatprep.subr.bf16.mxu0 0
  %320 = vmatpush1.bf16.msra.mxu0 0
  %321 = vmatprep.subr.bf16.mxu0 0
  %322 = vmatpush1.bf16.msra.mxu0 0
  %323 = vmatprep.subr.bf16.mxu0 0
  %324 = vmatpush1.bf16.msra.mxu0 0
  %325 = vmatprep.subr.bf16.mxu0 0
  %326 = vmatpush1.bf16.msra.mxu0 0
  %327 = vmatprep.subr.bf16.mxu0 0
  %328 = vmatpush1.bf16.msra.mxu0 0
  %329 = vmatprep.mubr.bf16.mxu0 0
  %330 = vmatmul.mubr.bf16.gmra.mrb[0].mxu0 %v225
  %v331 = vpop.f32.mrb[0].mxu0
  %v332 = vadd.f32 %v247, %v331
  %v333 = vpop.f32.mrb[0].mxu0
  %v334 = vpop.f32.mrb[0].mxu0
  %v335 = vadd.f32 %v247, %v334
  %v336 = vpop.f32.mrb[0].mxu0
  %337 = vdwg.mxu0
  %v338 = vmax.f32 %v332, 0.0
  %v339 = vmax.f32 %v335, 0.0
  %v340 = vld [vmem:[%s7] sm:$0xff]
  %v341 = vld [vmem:[%s7 + $0x8] sm:$0xff]
  %v342 = vld [vmem:[%s7 + $0x10] sm:$0xff]
  %v343 = vld [vmem:[%s7 + $0x18] sm:$0xff]
  %v344 = vld [vmem:[%s7 + $0x20] sm:$0xff]
  %v345 = vld [vmem:[%s7 + $0x28] sm:$0xff]
  %v346 = vld [vmem:[%s7 + $0x30] sm:$0xff]
  %v347 = vld [vmem:[%s7 + $0x38] sm:$0xff]
  %v348 = vld [vmem:[%s7 + $0x40] sm:$0xff]
  %v349 = vld [vmem:[%s7 + $0x48] sm:$0xff]
  %v350 = vld [vmem:[%s7 + $0x50] sm:$0xff]
  %v351 = vld [vmem:[%s7 + $0x58] sm:$0xff]
  %v352 = vld [vmem:[%s7 + $0x60] sm:$0xff]
  %v353 = vld [vmem:[%s7 + $0x68] sm:$0xff]
  %v354 = vld [vmem:[%s7 + $0x70] sm:$0xff]
  %v355 = vld [vmem:[%s7 + $0x78] sm:$0xff]
  %v356 = vld [vmem:[%s8] sm:$0x1]
  %v358 = vlaneseq
  %v359 = vshrl.u32 %v358, 7
  %v360 = vsub.s32 0, %v359
  %v361 = vrot.slane %v356, %v360
  %363 = vmatprep.subr.mxu0 0.0
  %364 = vmatpush1.msra.mxu0 %v340
  %365 = vmatprep.subr.mxu0 0.0
  %366 = vmatpush1.msra.mxu0 %v341
  %367 = vmatprep.subr.mxu0 0.0
  %368 = vmatpush1.msra.mxu0 %v342
  %369 = vmatprep.subr.mxu0 0.0
  %370 = vmatpush1.msra.mxu0 %v343
  %371 = vmatprep.subr.mxu0 0.0
  %372 = vmatpush1.msra.mxu0 %v344
  %373 = vmatprep.subr.mxu0 0.0
  %374 = vmatpush1.msra.mxu0 %v345
  %375 = vmatprep.subr.mxu0 0.0
  %376 = vmatpush1.msra.mxu0 %v346
  %377 = vmatprep.subr.mxu0 0.0
  %378 = vmatpush1.msra.mxu0 %v347
  %379 = vmatprep.subr.mxu0 0.0
  %380 = vmatpush1.msra.mxu0 %v348
  %381 = vmatprep.subr.mxu0 0.0
  %382 = vmatpush1.msra.mxu0 %v349
  %383 = vmatprep.subr.mxu0 0.0
  %384 = vmatpush1.msra.mxu0 %v350
  %385 = vmatprep.subr.mxu0 0.0
  %386 = vmatpush1.msra.mxu0 %v351
  %387 = vmatprep.subr.mxu0 0.0
  %388 = vmatpush1.msra.mxu0 %v352
  %389 = vmatprep.subr.mxu0 0.0
  %390 = vmatpush1.msra.mxu0 %v353
  %391 = vmatprep.subr.mxu0 0.0
  %392 = vmatpush1.msra.mxu0 %v354
  %393 = vmatprep.subr.mxu0 0.0
  %394 = vmatpush1.msra.mxu0 %v355
  %395 = vmatprep.subr.mxu0 0.0
  %396 = vmatpush1.msra.mxu0 0.0
  %397 = vmatprep.subr.mxu0 0.0
  %398 = vmatpush1.msra.mxu0 0.0
  %399 = vmatprep.subr.mxu0 0.0
  %400 = vmatpush1.msra.mxu0 0.0
  %401 = vmatprep.subr.mxu0 0.0
  %402 = vmatpush1.msra.mxu0 0.0
  %403 = vmatprep.subr.mxu0 0.0
  %404 = vmatpush1.msra.mxu0 0.0
  %405 = vmatprep.subr.mxu0 0.0
  %406 = vmatpush1.msra.mxu0 0.0
  %407 = vmatprep.subr.mxu0 0.0
  %408 = vmatpush1.msra.mxu0 0.0
  %409 = vmatprep.subr.mxu0 0.0
  %410 = vmatpush1.msra.mxu0 0.0
  %411 = vmatprep.subr.mxu0 0.0
  %412 = vmatpush1.msra.mxu0 0.0
  %413 = vmatprep.subr.mxu0 0.0
  %414 = vmatpush1.msra.mxu0 0.0
  %415 = vmatprep.subr.mxu0 0.0
  %416 = vmatpush1.msra.mxu0 0.0
  %417 = vmatprep.subr.mxu0 0.0
  %418 = vmatpush1.msra.mxu0 0.0
  %419 = vmatprep.subr.mxu0 0.0
  %420 = vmatpush1.msra.mxu0 0.0
  %421 = vmatprep.subr.mxu0 0.0
  %422 = vmatpush1.msra.mxu0 0.0
  %423 = vmatprep.subr.mxu0 0.0
  %424 = vmatpush1.msra.mxu0 0.0
  %425 = vmatprep.subr.mxu0 0.0
  %426 = vmatpush1.msra.mxu0 0.0
  %427 = vmatprep.mubr.f32.mxu0 0.0
  %428 = vmatmul.mubr.f32.gmra.mrb[0].mxu0 %v338
  %v429 = vpop.f32.mrb[0].mxu0
  %v430 = vadd.f32 %v361, %v429
  %v431 = vpop.f32.mrb[0].mxu0
  %432 = vmatprep.mubr.f32.mxu0 0.0
  %433 = vmatmul.mubr.f32.gmra.mrb[0].mxu0 %v339
  %v434 = vpop.f32.mrb[0].mxu0
  %v435 = vadd.f32 %v361, %v434
  %v436 = vpop.f32.mrb[0].mxu0
  %437 = vdwg.mxu0
  %vm438 = vcmask 64512
  %439 = vst.msk [vmem:[%s9] sm:$0xff] %vm438, %v430
  %440 = vst.msk [vmem:[%s9 + $0x8] sm:$0xff] %vm438, %v435
  // Predicated region
  $region38: #{fcnet_forward.1} parent=0 // pred_check
    _
  $region39: #{fcnet_forward.1} parent=0 // pred_check_branch
    %442 = sbr.rel (0) target = $region41
  $region40: #{fcnet_forward.1} parent=0 // pred_region
    _
  $region41: #{fcnet_forward.1} parent=0 // pred_fallthru
    _
  // Predicated region
  $region42: #{fcnet_forward.1} parent=0 // pred_check
    _
  $region43: #{fcnet_forward.1} parent=0 // pred_check_branch
    %444 = sbr.rel (0) target = $region45
  $region44: #{fcnet_forward.1} parent=0 // pred_region
    _
  $region45: #{fcnet_forward.1} parent=0 // pred_fallthru
    _

</llo_original>
